<compile_context>
chip_gen: v6e
topology: v6e:2x2x1
jax: 0.10.0
libtpu: 0.0.40
codegen_flags: <defaults>
</compile_context>

<pallas_src>
import functools

import jax
import jax.numpy as jnp
from jax.experimental import pallas as pl
from jax.experimental.pallas import tpu as pltpu


def _round_up(x: int, m: int) -> int:
    return ((x + m - 1) // m) * m


def _make_cluster_assignment_kernel(alpha: float, num_clusters: int, k_pad: int):
    power = float(alpha + 1.0) / 2.0
    inv_alpha = 1.0 / float(alpha)

    def kernel(x_ref, ct_ref, csq_ref, o_ref):
        x = x_ref[...]        # (TN, D)      f32 (pipelined)
        ct = ct_ref[...]      # (D, K_pad)   f32, pre-scaled by 2/alpha (resident)
        csq = csq_ref[...]    # (1, K_pad)   f32, ||c||^2/alpha, padded cols = 1e30

        # Cheap (TN, 1) column: 1 + ||x_n||^2 / alpha.
        x_sq = jnp.sum(x * x, axis=1, keepdims=True)
        x_term = (x_sq * inv_alpha + 1.0) if inv_alpha != 1.0 else (x_sq + 1.0)

        # MXU matmul, f32 accumulate: (2/alpha) * x @ c.T  (centers already scaled).
        gram2 = jnp.dot(x, ct, preferred_element_type=jnp.float32)   # (TN, K_pad)

        # t = 1 + ||x - c||^2/alpha, clamped at 1 (squared distance >= 0); padded
        # clusters see t ~ 1e30 (finite -> no inf-inf NaN path).
        t = jnp.maximum(x_term + csq - gram2, 1.0)

        # Exact reciprocal (approx vrcp would break the 1e-5 tolerance).
        numerator = pl.reciprocal(t)
        if power != 1.0:  # alpha == 1.0 (default) -> identity, skipped at trace time
            numerator = numerator ** power

        # Padded clusters contribute ~1e-30 each to the row sum: negligible.
        denom = jnp.sum(numerator, axis=1, keepdims=True)
        q = numerator * pl.reciprocal(denom)

        if k_pad != num_clusters:
            o_ref[...] = q[:, :num_clusters]   # write final (TN, K) directly
        else:
            o_ref[...] = q

    return kernel


@functools.partial(jax.jit, static_argnames=("alpha",))
def cluster_assignment(batch: jax.Array, cluster_centers: jax.Array,
                       alpha: float = 1.0) -> jax.Array:
    """Pallas TPU implementation of ClusterAssignment.forward.

    batch:            (N, D) float32
    cluster_centers:  (K, D) float32
    returns:          (N, K) float32 soft assignments (rows sum to 1).
    """
    N, D = batch.shape
    K, D2 = cluster_centers.shape
    assert D == D2, "embedding dims must match"

    # Cluster axis -> multiple of 128 (lane-dense intermediates & MXU N-dim).
    K_pad = _round_up(K, 128)

    # Row tile: large for HBM roofline, but keep >= 4 grid steps (v7x megacore)
    # and bound the pipelined VMEM footprint.
    TN = min(1024, _round_up(pl.cdiv(N, 4), 8))
    bytes_per_row = 4 * (2 * D + 4 * K_pad)          # pipelined bufs + temporaries
    row_budget = max(8, (20 * 1024 * 1024) // max(bytes_per_row, 1))
    TN = max(8, min(TN, (row_budget // 8) * 8))

    x = batch.astype(jnp.float32)                    # no N padding: ragged last block

    c = cluster_centers.astype(jnp.float32)
    if K_pad != K:
        c = jnp.pad(c, ((0, K_pad - K), (0, 0)))
    # (D, K_pad): lane-dense resident MXU operand, pre-scaled by 2/alpha.
    c_t = jnp.transpose(c) * (2.0 / float(alpha))
    # ||c||^2 / alpha; padded clusters poisoned with a large finite value so their
    # numerator underflows to ~0 without any in-kernel masking pass.
    c_sq = jnp.sum(c * c, axis=1) / float(alpha)
    if K_pad != K:
        c_sq = c_sq.at[K:].set(1e30)
    c_sq = c_sq.reshape(1, K_pad)

    kernel = _make_cluster_assignment_kernel(alpha, K, K_pad)
    grid = (pl.cdiv(N, TN),)

    # VMEM budget from the actual footprint (floor 32 MiB; allow more on v5e/v6e
    # when centers are large).
    vmem_need = 4 * (2 * TN * D + 2 * TN * K_pad + 2 * D * K_pad + 2 * K_pad
                     + 4 * TN * K_pad)
    vmem_limit = int(min(100 * 1024 * 1024, max(32 * 1024 * 1024, 2 * vmem_need)))

    return pl.pallas_call(
        kernel,
        out_shape=jax.ShapeDtypeStruct((N, K), jnp.float32),
        grid_spec=pltpu.PrefetchScalarGridSpec(
            num_scalar_prefetch=0,
            grid=grid,
            in_specs=[
                pl.BlockSpec((TN, D), lambda i: (i, 0)),      # batch tile (pipelined)
                pl.BlockSpec((D, K_pad), lambda i: (0, 0)),   # scaled centers^T, resident
                pl.BlockSpec((1, K_pad), lambda i: (0, 0)),   # ||c||^2/alpha, resident
            ],
            out_specs=pl.BlockSpec((TN, K), lambda i: (i, 0)),
        ),
        compiler_params=pltpu.CompilerParams(
            dimension_semantics=("parallel",),   # rows independent (2 TCs on v7x)
            vmem_limit_bytes=vmem_limit,
        ),
    )(x, c_t, c_sq)


def xavier_uniform(key, shape, dtype=jnp.float32):
    """Deterministic stand-in for nn.init.xavier_uniform_ on a (K, D) matrix."""
    fan_out, fan_in = shape  # torch treats dim0 as fan_out, dim1 as fan_in for 2D
    bound = (6.0 / (fan_in + fan_out)) ** 0.5
    return jax.random.uniform(key, shape, dtype=dtype, minval=-bound, maxval=bound)


def cluster_assignment_ref(batch, cluster_centers, alpha=1.0):
    """Pure-JAX reference mirroring the PyTorch forward exactly."""
    norm_squared = jnp.sum((batch[:, None, :] - cluster_centers[None, :, :]) ** 2, axis=2)
    numerator = 1.0 / (1.0 + norm_squared / alpha)
    power = float(alpha + 1.0) / 2.0
    numerator = numerator ** power
    return numerator / jnp.sum(numerator, axis=1, keepdims=True)


if __name__ == "__main__":
    key = jax.random.PRNGKey(0)
    k_batch, k_centers, k_batch2 = jax.random.split(key, 3)

    N, D, K = 8, 32, 4            # batch=8 samples, embedding_dimension=32, cluster_number=4
    alpha = 1.0

    batch = jax.random.normal(k_batch, (N, D), dtype=jnp.float32)
    cluster_centers = xavier_uniform(k_centers, (K, D))   # deterministic "parameter" init

    out = cluster_assignment(batch, cluster_centers, alpha=alpha)
    out = jax.block_until_ready(out)

    ref = cluster_assignment_ref(batch, cluster_centers, alpha=alpha)
    assert out.shape == (N, K)
    assert jnp.allclose(out, ref, atol=1e-5, rtol=1e-5), "mismatch vs reference"
    assert jnp.allclose(jnp.sum(out, axis=1), 1.0, atol=1e-5), "rows must sum to 1"

    # Ragged-N path: grid = cdiv(N, TN) with a masked last block, no wrapper padding.
    N2 = 19
    batch2 = jax.random.normal(k_batch2, (N2, D), dtype=jnp.float32)
    out2 = jax.block_until_ready(cluster_assignment(batch2, cluster_centers, alpha=alpha))
    ref2 = cluster_assignment_ref(batch2, cluster_centers, alpha=alpha)
    assert out2.shape == (N2, K)
    assert jnp.allclose(out2, ref2, atol=1e-5, rtol=1e-5), "ragged-N mismatch vs reference"
    assert jnp.allclose(jnp.sum(out2, axis=1), 1.0, atol=1e-5), "ragged rows must sum to 1"

    print("KERNEL_OK")
</pallas_src>

<mosaic_0001>
module attributes {stable_mosaic.version = 11 : i64} {
  func.func @kernel(%arg0: i32, %arg1: memref<8x32xf32, #tpu.memory_space<vmem>>, %arg2: memref<32x128xf32, #tpu.memory_space<vmem>>, %arg3: memref<1x128xf32, #tpu.memory_space<vmem>>, %arg4: memref<8x4xf32, #tpu.memory_space<vmem>>) attributes {dimension_semantics = [#tpu.dimension_semantics<parallel>], iteration_bounds = array<i64: 1>, scalar_prefetch = 0 : i64, scratch_operands = 0 : i64, tpu.core_type = #tpu.core_type<tc>, window_params = [{transform_indices = @transform_0, window_bounds = array<i64: 8, 32>}, {pipeline_mode = #tpu.pipeline_mode<synchronous>, transform_indices = @transform_1, window_bounds = array<i64: 32, 128>}, {pipeline_mode = #tpu.pipeline_mode<synchronous>, transform_indices = @transform_2, window_bounds = array<i64: 1, 128>}, {transform_indices = @transform_3, window_bounds = array<i64: 8, 4>}]} {
    %c0 = arith.constant 0 : index
    %c0_0 = arith.constant 0 : index
    %0 = vector.load %arg1[%c0, %c0_0] : memref<8x32xf32, #tpu.memory_space<vmem>>, vector<8x32xf32>
    %c0_1 = arith.constant 0 : index
    %c0_2 = arith.constant 0 : index
    %1 = vector.load %arg2[%c0_1, %c0_2] : memref<32x128xf32, #tpu.memory_space<vmem>>, vector<32x128xf32>
    %c0_3 = arith.constant 0 : index
    %c0_4 = arith.constant 0 : index
    %2 = vector.load %arg3[%c0_3, %c0_4] : memref<1x128xf32, #tpu.memory_space<vmem>>, vector<1x128xf32>
    %3 = arith.mulf %0, %0 : vector<8x32xf32>
    %cst = arith.constant dense<0.000000e+00> : vector<8xf32>
    %4 = vector.multi_reduction <add>, %3, %cst [1] : vector<8x32xf32> to vector<8xf32>
    %5 = vector.shape_cast %4 : vector<8xf32> to vector<8x1xf32>
    %cst_5 = arith.constant 1.000000e+00 : f32
    %6 = vector.broadcast %cst_5 : f32 to vector<8x1xf32>
    %7 = arith.addf %5, %6 : vector<8x1xf32>
    %cst_6 = arith.constant dense<0.000000e+00> : vector<8x128xf32>
    %8 = tpu.matmul %0, %1, %cst_6 {dimension_numbers = #tpu.dot_dimension_numbers<[1], [0], [0], [1], [0, 0, 1, 1], [], []>} : vector<8x32xf32>, vector<32x128xf32>, vector<8x128xf32> -> vector<8x128xf32>
    %9 = vector.broadcast %7 : vector<8x1xf32> to vector<8x128xf32>
    %10 = vector.broadcast %2 : vector<1x128xf32> to vector<8x128xf32>
    %11 = arith.addf %9, %10 : vector<8x128xf32>
    %12 = arith.subf %11, %8 : vector<8x128xf32>
    %cst_7 = arith.constant 1.000000e+00 : f32
    %13 = vector.broadcast %cst_7 : f32 to vector<8x128xf32>
    %14 = arith.maximumf %12, %13 : vector<8x128xf32>
    %15 = tpu.reciprocal %14 : vector<8x128xf32> -> vector<8x128xf32>
    %cst_8 = arith.constant dense<0.000000e+00> : vector<8xf32>
    %16 = vector.multi_reduction <add>, %15, %cst_8 [1] : vector<8x128xf32> to vector<8xf32>
    %17 = vector.shape_cast %16 : vector<8xf32> to vector<8x1xf32>
    %18 = tpu.reciprocal %17 : vector<8x1xf32> -> vector<8x1xf32>
    %19 = vector.broadcast %18 : vector<8x1xf32> to vector<8x128xf32>
    %20 = arith.mulf %15, %19 : vector<8x128xf32>
    %21 = vector.extract_strided_slice %20 {offsets = [0, 0], sizes = [8, 4], strides = [1, 1]} : vector<8x128xf32> to vector<8x4xf32>
    %c0_9 = arith.constant 0 : index
    %c0_10 = arith.constant 0 : index
    %22 = vector.load %arg4[%c0_9, %c0_10] : memref<8x4xf32, #tpu.memory_space<vmem>>, vector<8x4xf32>
    tpu.vector_store %arg4[%c0_9, %c0_10], %21 {strides = array<i32>} : memref<8x4xf32, #tpu.memory_space<vmem>>, vector<8x4xf32>,
    return
  }
  func.func @transform_0(%arg0: i32) -> (i32, i32) {
    %c0_i32 = arith.constant 0 : i32
    %c0_i32_0 = arith.constant 0 : i32
    return %arg0, %c0_i32 : i32, i32
  }
  func.func @transform_1(%arg0: i32) -> (i32, i32) {
    %c0_i32 = arith.constant 0 : i32
    %c0_i32_0 = arith.constant 0 : i32
    %c0_i32_1 = arith.constant 0 : i32
    return %c0_i32, %c0_i32_0 : i32, i32
  }
  func.func @transform_2(%arg0: i32) -> (i32, i32) {
    %c0_i32 = arith.constant 0 : i32
    %c0_i32_0 = arith.constant 0 : i32
    %c0_i32_1 = arith.constant 0 : i32
    return %c0_i32, %c0_i32_0 : i32, i32
  }
  func.func @transform_3(%arg0: i32) -> (i32, i32) {
    %c0_i32 = arith.constant 0 : i32
    %c0_i32_0 = arith.constant 0 : i32
    return %arg0, %c0_i32 : i32, i32
  }
}

</mosaic_0001>

<llo_original>
// kernel: cluster_assignment.1
$region0: #{cluster_assignment.1}
  #allocation0 [shape = 'u32[]', space=smem, size = 0x4, offset = 0x4, fixed_abs, tag = 'smem constant byte address 0x4 - core index']
  #allocation1 [shape = 'u32[144,128]{1,0:T(1,128)}', space=vmem, size = 0x12000, scoped, tag = 'internal scratch']
  %s0 = inlined_call_operand.vmem [shape: f32[8,32], index: 0, kind: input, shape index: {}]
  %s1 = inlined_call_operand.vmem [shape: f32[32,128], index: 1, kind: input, shape index: {}]
  %s2 = inlined_call_operand.vmem [shape: f32[1,128], index: 2, kind: input, shape index: {}]
  %s3 = inlined_call_operand.vmem [shape: f32[8,4], index: 3, kind: output, shape index: {}]
  %s4 = sld [smem:[#allocation0]]
  $region22: #{cluster_assignment.1} parent=0
    _
  %s6 = ssub.s32 1, %s4
  %s7 = scalar_select 0, %s6, %s4
  // Predicated region
  $region2: #{cluster_assignment.1} parent=0 // pred_check
    _
  $region3: #{cluster_assignment.1} parent=0 // pred_check_branch
    %9 = sbr.rel (0) target = $region5
  $region4: #{cluster_assignment.1} parent=0 // pred_region
    _
  $region5: #{cluster_assignment.1} parent=0 // pred_fallthru
    _
  // Predicated region
  $region6: #{cluster_assignment.1} parent=0 // pred_check
    _
  $region7: #{cluster_assignment.1} parent=0 // pred_check_branch
    %11 = sbr.rel (0) target = $region9
  $region8: #{cluster_assignment.1} parent=0 // pred_region
    _
  $region9: #{cluster_assignment.1} parent=0 // pred_fallthru
    _
  // Predicated region
  $region10: #{cluster_assignment.1} parent=0 // pred_check
    _
  $region11: #{cluster_assignment.1} parent=0 // pred_check_branch
    %13 = sbr.rel (0) target = $region13
  $region12: #{cluster_assignment.1} parent=0 // pred_region
    _
  $region13: #{cluster_assignment.1} parent=0 // pred_fallthru
    _
  %v14 = vld [vmem:[%s0] sm:$0xff]
  %v15 = vld [vmem:[%s1] sm:$0xff]
  %v16 = vld [vmem:[%s1 + $0x8] sm:$0xff]
  %v17 = vld [vmem:[%s1 + $0x10] sm:$0xff]
  %v18 = vld [vmem:[%s1 + $0x18] sm:$0xff]
  %v19 = vld [vmem:[%s2] sm:$0x1]
  %v20 = vmul.f32 %v14, %v14
  %vm21 = vcmask 261120
  %v22 = vsel %vm21, %v20, 0.0
  %23 = vadd.xlane.f32.xlu0 %v22
  %v24 = vpop.xlane.xlu0 %23
  %v25 = vadd.f32 %v24, 1.0
  %v27 = vsel %vm21, %v14, 0
  %29 = vmatprep.subr.mxu0 0.0
  %30 = vmatpush1.msra.mxu0 0.0
  %31 = vmatprep.subr.mxu0 0.0
  %32 = vmatpush1.msra.mxu0 0.0
  %33 = vmatprep.subr.mxu0 0.0
  %34 = vmatpush1.msra.mxu0 0.0
  %35 = vmatprep.subr.mxu0 0.0
  %36 = vmatpush1.msra.mxu0 0.0
  %37 = vmatprep.subr.mxu0 0.0
  %38 = vmatpush1.msra.mxu0 0.0
  %39 = vmatprep.subr.mxu0 0.0
  %40 = vmatpush1.msra.mxu0 0.0
  %41 = vmatprep.subr.mxu0 0.0
  %42 = vmatpush1.msra.mxu0 0.0
  %43 = vmatprep.subr.mxu0 0.0
  %44 = vmatpush1.msra.mxu0 0.0
  %45 = vmatprep.subr.mxu0 0.0
  %46 = vmatpush1.msra.mxu0 0.0
  %47 = vmatprep.subr.mxu0 0.0
  %48 = vmatpush1.msra.mxu0 0.0
  %49 = vmatprep.subr.mxu0 0.0
  %50 = vmatpush1.msra.mxu0 0.0
  %51 = vmatprep.subr.mxu0 0.0
  %52 = vmatpush1.msra.mxu0 0.0
  %53 = vmatprep.subr.mxu0 0.0
  %54 = vmatpush1.msra.mxu0 %v18
  %55 = vmatprep.subr.mxu0 0.0
  %56 = vmatpush1.msra.mxu0 %v17
  %57 = vmatprep.subr.mxu0 0.0
  %58 = vmatpush1.msra.mxu0 %v16
  %59 = vmatprep.subr.mxu0 0.0
  %60 = vmatpush1.msra.mxu0 %v15
  %61 = vmatprep.subr.mxu0 0.0
  %62 = vmatpush2.msra.mxu0 0.0
  %63 = vmatprep.subr.mxu0 0.0
  %64 = vmatpush2.msra.mxu0 0.0
  %65 = vmatprep.subr.mxu0 0.0
  %66 = vmatpush2.msra.mxu0 0.0
  %67 = vmatprep.subr.mxu0 0.0
  %68 = vmatpush2.msra.mxu0 0.0
  %69 = vmatprep.subr.mxu0 0.0
  %70 = vmatpush2.msra.mxu0 0.0
  %71 = vmatprep.subr.mxu0 0.0
  %72 = vmatpush2.msra.mxu0 0.0
  %73 = vmatprep.subr.mxu0 0.0
  %74 = vmatpush2.msra.mxu0 0.0
  %75 = vmatprep.subr.mxu0 0.0
  %76 = vmatpush2.msra.mxu0 0.0
  %77 = vmatprep.subr.mxu0 0.0
  %78 = vmatpush2.msra.mxu0 0.0
  %79 = vmatprep.subr.mxu0 0.0
  %80 = vmatpush2.msra.mxu0 0.0
  %81 = vmatprep.subr.mxu0 0.0
  %82 = vmatpush2.msra.mxu0 0.0
  %83 = vmatprep.subr.mxu0 0.0
  %84 = vmatpush2.msra.mxu0 0.0
  %85 = vmatprep.subr.mxu0 0.0
  %86 = vmatpush2.msra.mxu0 0.0
  %87 = vmatprep.subr.mxu0 0.0
  %88 = vmatpush2.msra.mxu0 0.0
  %89 = vmatprep.subr.mxu0 0.0
  %90 = vmatpush2.msra.mxu0 0.0
  %91 = vmatprep.subr.mxu0 0.0
  %92 = vmatpush2.msra.mxu0 0.0
  %93 = vmatprep.mubr.f32.mxu0 0.0
  %94 = vmatmul.mubr.f32.gmra.mxu0 %v27
  %v95 = vpop.f32.mrf.mxu0
  %v96 = vadd.f32 0.0, %v95
  %v97 = vpop.f32.mrf.mxu0
  %98 = vdwg.mxu0
  %v100 = vlaneseq
  %v101 = vshrl.u32 %v100, 7
  %v102 = vsub.s32 0, %v101
  %v103 = vrot.slane %v19, %v102
  %v105 = vadd.f32 %v25, %v103
  %v106 = vsub.f32 %v105, %v96
  %v107 = vmax.f32 %v106, 1.0
  %v108 = vrcp.pop %v107
  %109 = vadd.xlane.f32.xlu0 %v108
  %v110 = vpop.xlane.xlu0 %109
  %v111 = vrcp.pop %v110
  %v112 = vmul.f32 %v108, %v111
  %vm113 = vcmask 31744
  %114 = vst.msk [vmem:[%s3] sm:$0xff] %vm113, %v112
  // Predicated region
  $region14: #{cluster_assignment.1} parent=0 // pred_check
    _
  $region15: #{cluster_assignment.1} parent=0 // pred_check_branch
    %116 = sbr.rel (0) target = $region17
  $region16: #{cluster_assignment.1} parent=0 // pred_region
    _
  $region17: #{cluster_assignment.1} parent=0 // pred_fallthru
    _
  // Predicated region
  $region18: #{cluster_assignment.1} parent=0 // pred_check
    _
  $region19: #{cluster_assignment.1} parent=0 // pred_check_branch
    %118 = sbr.rel (0) target = $region21
  $region20: #{cluster_assignment.1} parent=0 // pred_region
    _
  $region21: #{cluster_assignment.1} parent=0 // pred_fallthru
    _

</llo_original>
